<compile_context>
chip_gen: v5e
topology: v5e:2x2
jax: 0.10.0
libtpu: 0.0.40
codegen_flags: <defaults>
</compile_context>

<pallas_src>
import math
import functools

import numpy as np
import jax
import jax.numpy as jnp
from jax import lax
from jax.experimental import pallas as pl


# ----------------------------------------------------------------------------
# Pallas kernel: training-mode LOUPE soft-mask generation (lane-dense (1, W_pad))
# ----------------------------------------------------------------------------
def _loupe_kernel(wt_ref, o_ref, *, pmask_slope, sample_slope, sparsity, valid_w):
    # wt_ref: (2, W_pad) f32 in VMEM  -- row 0 = weight (zero-padded),
    #                                    row 1 = thresh (zero-padded)
    # o_ref : (1, W_pad) f32 in VMEM  -- soft mask (padded lanes are garbage,
    #                                    sliced away by the wrapper)
    w = wt_ref[0:1, :]                                   # (1, W_pad)
    thresh = wt_ref[1:2, :]                              # (1, W_pad)

    # sigmoid(weight * pmask_slope)
    s = jax.nn.sigmoid(w * pmask_slope)                  # (1, W_pad)

    # rescale_prob: mean over the *valid* W lanes only (padding must not
    # pollute the branch).
    lane = lax.broadcasted_iota(jnp.int32, s.shape, 1)   # (1, W_pad)
    valid = (lane < valid_w).astype(jnp.float32)
    xbar = jnp.sum(s * valid, axis=1, keepdims=True) * (1.0 / valid_w)  # (1, 1)

    # Clamp keeps the unselected where-branch finite even for degenerate xbar.
    xbar = jnp.clip(xbar, 1e-6, 1.0 - 1e-6)

    inv_xbar = pl.reciprocal(xbar)                       # EUP slot
    inv_cbar = pl.reciprocal(1.0 - xbar)
    scaled_down = s * (sparsity * inv_xbar)
    scaled_up = 1.0 - (1.0 - s) * ((1.0 - sparsity) * inv_cbar)
    pmask = jnp.where(xbar > sparsity, scaled_down, scaled_up)          # (1, W_pad)

    # soft sampling threshold
    o_ref[...] = jax.nn.sigmoid((pmask - thresh) * sample_slope)


def loupe_mask_forward(weight, thresh, shape, sparsity, pmask_slope, sample_slope):
    """weight: (W,) f32, thresh: (1, W) f32 -> (1, 1, H, W) f32 (NCHW).

    Matches PyTorch LOUPEMask.forward() in training mode (example == ones).
    """
    H, W = shape
    w_pad = ((W + 127) // 128) * 128

    # Pack weight + thresh into one lane-dense (2, W_pad) tile (single DMA).
    wt = jnp.zeros((2, w_pad), jnp.float32)
    wt = wt.at[0, :W].set(jnp.asarray(weight, jnp.float32).reshape(W))
    wt = wt.at[1, :W].set(jnp.asarray(thresh, jnp.float32).reshape(W))

    kernel = functools.partial(
        _loupe_kernel,
        pmask_slope=float(pmask_slope),
        sample_slope=float(sample_slope),
        sparsity=float(sparsity),
        valid_w=int(W),
    )

    soft_pad = pl.pallas_call(
        kernel,
        out_shape=jax.ShapeDtypeStruct((1, w_pad), jnp.float32),
        in_specs=[pl.BlockSpec((2, w_pad), lambda: (0, 0))],
        out_specs=pl.BlockSpec((1, w_pad), lambda: (0, 0)),
    )(wt)

    soft = soft_pad[:, :W]                               # (1, W) valid lanes
    # example (all ones, NCHW) * soft[:, None, None, :] -> pure broadcast over
    # H, left to XLA (fuses into the consumer; no H x redundant HBM store).
    return jnp.broadcast_to(soft[:, None, None, :], (1, 1, H, W))


# ----------------------------------------------------------------------------
# Deterministic parameter init replicating RandomMask / LOUPEMask.__init__
# ----------------------------------------------------------------------------
def make_random_mask_pruned(sparsity, shape, CL_num, key):
    """Replicates RandomMask.__init__ deterministically (numpy + jax PRNG)."""
    H, W = shape
    other_ratio = (sparsity * W - CL_num[1]) / (W - CL_num[1])
    prob = np.ones(W, dtype=np.float32) * 2.0
    c0 = W // 2 - CL_num[1] // 2
    prob[c0:c0 + CL_num[1]] = other_ratio
    thresh = np.asarray(jax.random.uniform(key, (W,), dtype=jnp.float32))
    k = math.floor(sparsity * W - CL_num[1])
    pruned = np.zeros((H, W), dtype=bool)
    if k > 0:
        ind = np.argsort(-(prob - thresh), kind="stable")[:k]
        pruned[:, ind] = True
    r0 = H // 2 - CL_num[0] // 2
    pruned[r0:r0 + CL_num[0], c0:c0 + CL_num[1]] = True
    return pruned


def make_loupe_weight(pruned, pmask_slope, eps=1e-6):
    """weight = -log(1/x - 1)/pmask_slope, x = |pruned[0,:] - eps|."""
    x = np.abs(pruned[0, :].astype(np.float32) - eps)
    return jnp.asarray(-np.log(1.0 / x - 1.0) / pmask_slope, dtype=jnp.float32)


# TODO(synk): eval-mode branch (hard top-k + scatter into `pruned`) has no clean
# Pallas equivalent; only the default training-mode soft-threshold path is
# implemented.  When a real downstream k-space tensor exists, fuse the
# `example * mask` multiply into this kernel instead of broadcasting outside.


if __name__ == "__main__":
    # Small, deterministic configuration.
    sparsity = 0.5
    shape = (16, 16)          # (H, W) k-space mask shape
    CL_num = (4, 4)
    pmask_slope = 5.0
    sample_slope = 48.0

    key = jax.random.PRNGKey(0)
    k_init, k_thresh = jax.random.split(key)

    # __init__: RandomMask -> weight
    pruned0 = make_random_mask_pruned(sparsity, shape, CL_num, k_init)
    weight = make_loupe_weight(pruned0, pmask_slope)                 # (W,)

    # forward: thresh ~ U(0,1), shape (example.shape[0]=1, W)
    thresh = jax.random.uniform(k_thresh, (1, shape[1]), dtype=jnp.float32)

    out = loupe_mask_forward(weight, thresh, shape, sparsity,
                             pmask_slope, sample_slope)
    out = jax.block_until_ready(out)

    # Reference check in plain JAX (same math as PyTorch training forward).
    s = jax.nn.sigmoid(weight * pmask_slope)
    xbar = jnp.mean(s)
    pmask = jnp.where(xbar > sparsity,
                      s * sparsity / xbar,
                      1.0 - (1.0 - s) * (1.0 - sparsity) / (1.0 - xbar))
    ref = (jnp.ones((1, 1, shape[0], shape[1]), jnp.float32)
           * jax.nn.sigmoid((pmask[None, :] - thresh) * sample_slope)[:, None, None, :])
    assert out.shape == (1, 1, shape[0], shape[1])
    np.testing.assert_allclose(np.asarray(out), np.asarray(ref), rtol=1e-5, atol=1e-5)

    print("KERNEL_OK")
</pallas_src>

<mosaic_0001>
module attributes {stable_mosaic.version = 11 : i64} {
  func.func @_loupe_kernel(%arg0: memref<2x128xf32, #tpu.memory_space<vmem>>, %arg1: memref<1x128xf32, #tpu.memory_space<vmem>>) attributes {dimension_semantics = [], scalar_prefetch = 0 : i64, scratch_operands = 0 : i64, tpu.core_type = #tpu.core_type<tc>} {
    %c0 = arith.constant 0 : index
    %c0_0 = arith.constant 0 : index
    %0 = vector.load %arg0[%c0, %c0_0] : memref<2x128xf32, #tpu.memory_space<vmem>>, vector<1x128xf32>
    %c1 = arith.constant 1 : index
    %c0_1 = arith.constant 0 : index
    %1 = vector.load %arg0[%c1, %c0_1] : memref<2x128xf32, #tpu.memory_space<vmem>>, vector<1x128xf32>
    %cst = arith.constant 5.000000e+00 : f32
    %2 = vector.broadcast %cst : f32 to vector<1x128xf32>
    %3 = arith.mulf %0, %2 : vector<1x128xf32>
    %4 = arith.negf %3 : vector<1x128xf32>
    %5 = math.exp %4 : vector<1x128xf32>
    %cst_2 = arith.constant 1.000000e+00 : f32
    %6 = vector.broadcast %cst_2 : f32 to vector<1x128xf32>
    %7 = arith.addf %6, %5 : vector<1x128xf32>
    %8 = arith.divf %6, %7 : vector<1x128xf32>
    %9 = tpu.iota {dimensions = array<i32: 1>} : vector<1x128xi32>
    %c16_i32 = arith.constant 16 : i32
    %10 = vector.broadcast %c16_i32 : i32 to vector<1x128xi32>
    %11 = arith.cmpi slt, %9, %10 : vector<1x128xi32>
    %12 = arith.extui %11 : vector<1x128xi1> to vector<1x128xi32>
    %13 = arith.sitofp %12 : vector<1x128xi32> to vector<1x128xf32>
    %14 = arith.mulf %8, %13 : vector<1x128xf32>
    %cst_3 = arith.constant dense<0.000000e+00> : vector<1xf32>
    %15 = vector.multi_reduction <add>, %14, %cst_3 [1] : vector<1x128xf32> to vector<1xf32>
    %16 = vector.shape_cast %15 : vector<1xf32> to vector<1x1xf32>
    %cst_4 = arith.constant 6.250000e-02 : f32
    %17 = vector.broadcast %cst_4 : f32 to vector<1x1xf32>
    %18 = arith.mulf %16, %17 : vector<1x1xf32>
    %cst_5 = arith.constant 9.99999997E-7 : f32
    %cst_6 = arith.constant 0.999998986 : f32
    %19 = vector.broadcast %cst_5 : f32 to vector<1x1xf32>
    %20 = arith.maximumf %19, %18 : vector<1x1xf32>
    %21 = vector.broadcast %cst_6 : f32 to vector<1x1xf32>
    %22 = arith.minimumf %21, %20 : vector<1x1xf32>
    %23 = tpu.reciprocal %22 : vector<1x1xf32> -> vector<1x1xf32>
    %cst_7 = arith.constant 1.000000e+00 : f32
    %24 = vector.broadcast %cst_7 : f32 to vector<1x1xf32>
    %25 = arith.subf %24, %22 : vector<1x1xf32>
    %26 = tpu.reciprocal %25 : vector<1x1xf32> -> vector<1x1xf32>
    %cst_8 = arith.constant 5.000000e-01 : f32
    %27 = vector.broadcast %cst_8 : f32 to vector<1x1xf32>
    %28 = arith.mulf %27, %23 : vector<1x1xf32>
    %29 = vector.broadcast %28 : vector<1x1xf32> to vector<1x128xf32>
    %30 = arith.mulf %8, %29 : vector<1x128xf32>
    %cst_9 = arith.constant 1.000000e+00 : f32
    %31 = vector.broadcast %cst_9 : f32 to vector<1x128xf32>
    %32 = arith.subf %31, %8 : vector<1x128xf32>
    %cst_10 = arith.constant 5.000000e-01 : f32
    %33 = vector.broadcast %cst_10 : f32 to vector<1x1xf32>
    %34 = arith.mulf %33, %26 : vector<1x1xf32>
    %35 = vector.broadcast %34 : vector<1x1xf32> to vector<1x128xf32>
    %36 = arith.mulf %32, %35 : vector<1x128xf32>
    %cst_11 = arith.constant 1.000000e+00 : f32
    %37 = vector.broadcast %cst_11 : f32 to vector<1x128xf32>
    %38 = arith.subf %37, %36 : vector<1x128xf32>
    %cst_12 = arith.constant 5.000000e-01 : f32
    %39 = vector.broadcast %cst_12 : f32 to vector<1x1xf32>
    %40 = arith.cmpf ogt, %22, %39 : vector<1x1xf32>
    %41 = vector.shape_cast %40 : vector<1x1xi1> to vector<1x1xi1>
    %42 = vector.broadcast %41 : vector<1x1xi1> to vector<1x128xi1>
    %43 = arith.select %42, %30, %38 : vector<1x128xi1>, vector<1x128xf32>
    %44 = arith.subf %43, %1 : vector<1x128xf32>
    %cst_13 = arith.constant 4.800000e+01 : f32
    %45 = vector.broadcast %cst_13 : f32 to vector<1x128xf32>
    %46 = arith.mulf %44, %45 : vector<1x128xf32>
    %47 = arith.negf %46 : vector<1x128xf32>
    %48 = math.exp %47 : vector<1x128xf32>
    %cst_14 = arith.constant 1.000000e+00 : f32
    %49 = vector.broadcast %cst_14 : f32 to vector<1x128xf32>
    %50 = arith.addf %49, %48 : vector<1x128xf32>
    %51 = arith.divf %49, %50 : vector<1x128xf32>
    %c0_15 = arith.constant 0 : index
    %c0_16 = arith.constant 0 : index
    %52 = vector.load %arg1[%c0_15, %c0_16] : memref<1x128xf32, #tpu.memory_space<vmem>>, vector<1x128xf32>
    tpu.vector_store %arg1[%c0_15, %c0_16], %51 {strides = array<i32>} : memref<1x128xf32, #tpu.memory_space<vmem>>, vector<1x128xf32>,
    return
  }
}

</mosaic_0001>

<llo_original>
// kernel: tpu_custom_call.1
$region0: #{tpu_custom_call.1}
  #allocation0 [shape = 'u32[]', space=smem, size = 0x4, offset = 0x4, fixed_abs, tag = 'smem constant byte address 0x4 - core index']
  #allocation1 [shape = 'u32[72,128]{1,0:T(1,128)}', space=vmem, size = 0x9000, scoped, tag = 'internal scratch']
  %s0 = inlined_call_operand.hbm [shape: f32[2,128], index: 0, kind: input, shape index: {}]
  %s1 = inlined_call_operand.hbm [shape: f32[1,128], index: 1, kind: output, shape index: {}]
  %s2 = sld [smem:[#allocation0]]
  $region18: #{tpu_custom_call.1} parent=0
    _
  %s4 = ssub.s32 1, %s2
  %s5 = scalar_select 0, %s4, %s2
  $region1: #{tpu_custom_call.1} parent=0
    #allocation2 [shape = 'u8[1024]{0}', space=vmem, size = 0x400, scoped, tag = 'input window, operand 0, single buffered']
    #allocation3 [shape = 's32[1]{0}', space=sflag, size = 0x4, scoped, tag = 'scoped memory for tpu_custom_call.1']
    #allocation4 [shape = 's32[1]{0}', space=sflag, size = 0x4, scoped, tag = 'scoped memory for tpu_custom_call.1']
    #allocation5 [shape = 'u8[512]{0}', space=vmem, size = 0x400, scoped, tag = 'output window, operand 0, single buffered']
    %6 = vsyncpa [#allocation3], 0
    %7 = vsyncpa [#allocation4], 0
    // Predicated region
    $region2: #{tpu_custom_call.1} parent=1 // pred_check
      _
    $region3: #{tpu_custom_call.1} parent=1 // pred_check_branch
      %9 = sbr.rel (0) target = $region5
    $region4: #{tpu_custom_call.1} parent=1 // pred_region
      %11 = vsyncadd [#allocation3], 0
      %s13 = sshll.u32 %s0, 4
      %s14 = int_to_ptr.hbm [resolvable:$true] %s13
      %s15 = sshll.u32 [#allocation2], 4
      %s16 = int_to_ptr.vmem [resolvable:$true] %s15
      %18 = dma.hbm_to_vmem [thread:$0]  %s14, 32, %s16, [#allocation3]
    $region5: #{tpu_custom_call.1} parent=1 // pred_fallthru
      _
    // Predicated region
    $region6: #{tpu_custom_call.1} parent=1 // pred_check
      _
    $region7: #{tpu_custom_call.1} parent=1 // pred_check_branch
      %20 = sbr.rel (0) target = $region9
    $region8: #{tpu_custom_call.1} parent=1 // pred_region
      %22 = dma.done [#allocation3], 32
    $region9: #{tpu_custom_call.1} parent=1 // pred_fallthru
      _
    %v23 = vld [vmem:[#allocation2] sm:$0x1]
    %v24 = vld [vmem:[#allocation2 + $0x1] sm:$0x1]
    %v25 = vmul.f32 %v23, 5.0
    %v26 = vxor.u32 %v25, 2147483648
    %v27 = vmul.f32 %v26, 1.442695
    %v28 = vpow.pop %v27
    %v29 = vadd.f32 %v28, 1.0
    %v30 = vrcp.pop %v29
    %v31 = vmul.f32 %v29, %v30
    %v32 = vsub.f32 1.0, %v31
    %v33 = vmul.f32 %v30, %v32
    %v34 = vadd.f32 %v30, %v33
    %vm35 = vweird.f32 %v29
    %vm36 = vweird.f32 %v30
    %vm37 = vmor %vm35, %vm36
    %v38 = vsel %vm37, %v30, %v34
    %v39 = vand.u32 2147483647, %v29
    %vm40 = vcmp.eq.f32.partialorder %v39, 8.507059e+37
    %v41 = vand.u32 %v29, 2147483648
    %v42 = vor.u32 1.1754944e-38, %v41
    %v43 = vsel %vm40, %v42, %v38
    %v44 = vmul.f32 1.0, %v43
    %v45 = vlaneseq
    %v46 = vand.u32 %v45, 127
    %vm47 = vcmp.lt.s32.totalorder %v46, 16
    %v48 = vsel %vm47, 1, 0
    %v49 = vcvt.s32.f32 %v48
    %v50 = vmul.f32 %v44, %v49
    %vm51 = vcmask 1040384
    %v52 = vsel %vm51, %v50, 0.0
    %53 = vadd.xlane.f32.xlu0 %v52
    %v54 = vpop.xlane.xlu0 %53
    %v55 = vmul.f32 %v54, 0.0625
    %v56 = vmax.f32 %v55, 1e-06
    %v57 = vmin.f32 %v56, 0.999999
    %v58 = vrcp.pop %v57
    %v59 = vmul.f32 %v57, %v58
    %v60 = vsub.f32 1.0, %v59
    %v61 = vmul.f32 %v58, %v60
    %v62 = vadd.f32 %v58, %v61
    %vm63 = vweird.f32 %v57
    %vm64 = vweird.f32 %v58
    %vm65 = vmor %vm63, %vm64
    %v66 = vsel %vm65, %v58, %v62
    %v67 = vand.u32 2147483647, %v57
    %vm68 = vcmp.eq.f32.partialorder %v67, 8.507059e+37
    %v69 = vand.u32 %v57, 2147483648
    %v70 = vor.u32 1.1754944e-38, %v69
    %v71 = vsel %vm68, %v70, %v66
    %v72 = vsub.f32 1.0, %v57
    %v73 = vrcp.pop %v72
    %v74 = vmul.f32 %v72, %v73
    %v75 = vsub.f32 1.0, %v74
    %v76 = vmul.f32 %v73, %v75
    %v77 = vadd.f32 %v73, %v76
    %vm78 = vweird.f32 %v72
    %vm79 = vweird.f32 %v73
    %vm80 = vmor %vm78, %vm79
    %v81 = vsel %vm80, %v73, %v77
    %v82 = vand.u32 2147483647, %v72
    %vm83 = vcmp.eq.f32.partialorder %v82, 8.507059e+37
    %v84 = vand.u32 %v72, 2147483648
    %v85 = vor.u32 1.1754944e-38, %v84
    %v86 = vsel %vm83, %v85, %v81
    %v87 = vmul.f32 %v71, 0.5
    %v88 = vmul.f32 %v44, %v87
    %v89 = vsub.f32 1.0, %v44
    %v90 = vmul.f32 %v86, 0.5
    %v91 = vmul.f32 %v89, %v90
    %v92 = vsub.f32 1.0, %v91
    %vm93 = vcmp.gt.f32.partialorder %v57, 0.5
    %v94 = vsel %vm93, 1, 0
    %vm95 = vcmp.eq.s32.totalorder %v94, 1
    %v96 = vsel %vm95, %v88, %v92
    %v97 = vsub.f32 %v96, %v24
    %v98 = vmul.f32 %v97, 48.0
    %v99 = vxor.u32 %v98, 2147483648
    %v100 = vmul.f32 %v99, 1.442695
    %v101 = vpow.pop %v100
    %v102 = vadd.f32 %v101, 1.0
    %v103 = vrcp.pop %v102
    %v104 = vmul.f32 %v102, %v103
    %v105 = vsub.f32 1.0, %v104
    %v106 = vmul.f32 %v103, %v105
    %v107 = vadd.f32 %v103, %v106
    %vm108 = vweird.f32 %v102
    %vm109 = vweird.f32 %v103
    %vm110 = vmor %vm108, %vm109
    %v111 = vsel %vm110, %v103, %v107
    %v112 = vand.u32 2147483647, %v102
    %vm113 = vcmp.eq.f32.partialorder %v112, 8.507059e+37
    %v114 = vand.u32 %v102, 2147483648
    %v115 = vor.u32 1.1754944e-38, %v114
    %v116 = vsel %vm113, %v115, %v111
    %v117 = vmul.f32 1.0, %v116
    %118 = vst [vmem:[#allocation5] sm:$0x1] %v117
    // Predicated region
    $region10: #{tpu_custom_call.1} parent=1 // pred_check
      _
    $region11: #{tpu_custom_call.1} parent=1 // pred_check_branch
      %120 = sbr.rel (0) target = $region13
    $region12: #{tpu_custom_call.1} parent=1 // pred_region
      %122 = vsyncadd [#allocation4], 0
      %s124 = sshll.u32 [#allocation5], 4
      %s125 = int_to_ptr.vmem [resolvable:$true] %s124
      %s126 = sshll.u32 %s1, 4
      %s127 = int_to_ptr.hbm [resolvable:$true] %s126
      %129 = dma.vmem_to_hbm [thread:$0]  %s125, 16, %s127, [#allocation4]
    $region13: #{tpu_custom_call.1} parent=1 // pred_fallthru
      _
    // Predicated region
    $region14: #{tpu_custom_call.1} parent=1 // pred_check
      _
    $region15: #{tpu_custom_call.1} parent=1 // pred_check_branch
      %131 = sbr.rel (0) target = $region17
    $region16: #{tpu_custom_call.1} parent=1 // pred_region
      %133 = dma.done [#allocation4], 16
    $region17: #{tpu_custom_call.1} parent=1 // pred_fallthru
      _
    %134 = vsyncpa [#allocation3], 1
    %135 = vsyncpa [#allocation4], 1

</llo_original>
